<compile_context>
chip_gen: v7x
topology: tpu7x:2x2x1
jax: 0.10.0
libtpu: 0.0.40
codegen_flags: <defaults>
</compile_context>

<pallas_src>
import functools

import jax
import jax.numpy as jnp
from jax.experimental import pallas as pl
from jax.experimental.pallas import tpu as pltpu

INPUT_DIM = 1
HIDDEN_DIMS = [128, 64, 32]
OUTPUT_DIM = 1
BN_EPS = 1e-5
TARGET_MEAN = 0.5
TARGET_STD = 0.1
L2_LAMBDA = 1e-4

_OUT_SHIFT = TARGET_MEAN - 0.5 * TARGET_STD  # folded output affine


def _tpu_config():
  """Per-generation knobs: VPU dtype, max batch tile, scoped-VMEM limit."""
  kind = ""
  try:
    devs = jax.devices()
    if devs:
      kind = (getattr(devs[0], "device_kind", "") or "").lower()
  except Exception:  # pragma: no cover - defensive
    kind = ""
  is_v7 = "v7" in kind
  is_v6 = "v6" in kind
  is_v5 = "v5" in kind
  # bf16 VALU exists on v6e/v7x; v5e (and older/unknown) stay f32 on the VPU.
  vpu_dtype = jnp.bfloat16 if (is_v6 or is_v7) else jnp.float32
  if is_v5 or is_v6 or is_v7:
    tb_max = 8192
    # v7x: 64 MiB physical VMEM per TC -> cap at 48 MiB.
    # v5e/v6e: 128 MiB physical, default scoped is only 16/32 MiB -> raise.
    vmem_limit = (48 << 20) if is_v7 else (64 << 20)
  else:
    tb_max = 2048
    vmem_limit = None
  split_grid = is_v7  # 2 TensorCores per chip -> want >= 2 parallel grid steps
  return vpu_dtype, tb_max, vmem_limit, split_grid


_VPU_DTYPE, _TB_MAX, _VMEM_LIMIT, _SPLIT_GRID = _tpu_config()


def _scoring_kernel(x_ref, w1_ref, b1_ref, w2_ref, b2_ref, w3_ref, b3_ref,
                    w4_ref, b4_ref, o_ref, *, vpu_dtype):
  # x_ref: (1, TB) f32 ; hidden tiles are (dim, TB).
  x = x_ref[...].astype(vpu_dtype)

  # Layer 1 (in=1): folded (input BN + Linear(1->128) + BN) as a VPU broadcast
  # multiply-add -- no K=1 MXU op.  bf16 on v6e/v7x halves the dominant VALU
  # work; the .astype is a no-op there (already bf16) and the layer-2 pack on
  # v5e.  NOTE: the (dim,1)x(1,TB) broadcasts are expected to lower as
  # lane/sublane splats, not materialized temporaries (verified structure).
  h = jnp.maximum(w1_ref[...] * x + b1_ref[...], 0)           # (128, TB)
  h = h.astype(jnp.bfloat16)

  # Layer 2: Linear(128->64)+BN folded, bf16 MXU operands, f32 accumulation.
  # Epilogue (bias + ReLU) in vpu_dtype; the bf16 cast is needed anyway for
  # the layer-3 matmul, so doing it first saves VALU work on v6e/v7x.
  h = jnp.dot(w2_ref[...], h, preferred_element_type=jnp.float32)   # (64, TB)
  h = jnp.maximum(h.astype(vpu_dtype) + b2_ref[...], 0)
  h = h.astype(jnp.bfloat16)

  # Layer 3: Linear(64->32)+BN folded.  Epilogue stays f32 (feeds the VPU/XLU
  # final stage, no extra cast required).
  h = jnp.dot(w3_ref[...], h, preferred_element_type=jnp.float32)   # (32, TB)
  h = jnp.maximum(h + b3_ref[...], 0.0)

  # Final Linear(32->1): multiply + sublane reduce instead of a 1-wide matmul.
  s = jnp.sum(h * w4_ref[...], axis=0, keepdims=True) + b4_ref[...]  # (1, TB)

  # sigmoid (EUP reciprocal) + folded target affine:
  #   out = (mean - 0.5*std) + std * sigmoid(s)
  sig = pl.reciprocal(1.0 + jnp.exp(-s), approx=True)
  o_ref[...] = (_OUT_SHIFT + TARGET_STD * sig).astype(o_ref.dtype)


def _const_spec(shape):
  # Whole-array block, resident across all batch tiles.
  return pl.BlockSpec(shape, lambda i: (0, 0))


@jax.jit
def scoring_forward(x, params):
  """ScoringFunction.forward (eval mode). Returns (scores, l2_reg)."""
  # ---- fold BatchNorm (eval) into linear weights/biases (plain-JAX glue) ----
  def bn_scale_shift(bn):
    s = bn["gamma"] / jnp.sqrt(bn["running_var"] + BN_EPS)
    t = bn["beta"] - bn["running_mean"] * s
    return s, t

  s0, t0 = bn_scale_shift(params["input_norm"])  # input BN folds into layer 1

  folded = []
  prev_scale, prev_shift = s0, t0
  for layer in params["layers"]:
    W = layer["W"]                      # (out, in) PyTorch convention
    b = layer["b"]                      # (out,)
    s, t = bn_scale_shift(layer["bn"])
    # transposed (batch-on-lanes) layout: y = W_fold @ x + bias[:, None]
    W_fold = W * prev_scale[None, :] * s[:, None]        # (out, in)
    bias = (W @ prev_shift + b) * s + t                  # (out,)
    folded.append((W_fold, bias))
    prev_scale = jnp.ones_like(s)
    prev_shift = jnp.zeros_like(t)

  (w1, b1), (w2, b2), (w3, b3) = folded
  w4 = params["final"]["W"]             # (1, 32)
  b4 = params["final"]["b"]             # (1,)

  # Kernel operand prep: biases as columns; MXU weights in bf16; VPU-path
  # operands in the per-chip VPU dtype.
  w1 = w1.astype(_VPU_DTYPE)                             # (128, 1)  VPU path
  b1c = b1.reshape(-1, 1).astype(_VPU_DTYPE)
  w2 = w2.astype(jnp.bfloat16)                           # (64, 128)
  b2c = b2.reshape(-1, 1).astype(_VPU_DTYPE)
  w3 = w3.astype(jnp.bfloat16)                           # (32, 64)
  b3c = b3.reshape(-1, 1).astype(jnp.float32)
  w4c = w4.T.astype(jnp.float32)                         # (32, 1)
  b4c = b4.reshape(1, 1).astype(jnp.float32)

  # ---- batch-on-lanes layout; no wrapper-side pad (partial edge blocks) -----
  n = x.shape[0]
  x_t = x.reshape(1, n).astype(jnp.float32)              # free reshape (in=1)
  n_lane = -(-n // 128) * 128                            # lane multiple
  tb = min(_TB_MAX, n_lane)
  if _SPLIT_GRID and n_lane > 128:
    # Ensure >= 2 grid steps so both v7x TensorCores get work.
    half = -(-(n_lane // 2) // 128) * 128
    tb = min(tb, max(128, half))
  grid = (pl.cdiv(n, tb),)

  kernel = functools.partial(_scoring_kernel, vpu_dtype=_VPU_DTYPE)
  kernel_args = (x_t, w1, b1c, w2, b2c, w3, b3c, w4c, b4c)
  in_specs = [pl.BlockSpec((1, tb), lambda i: (0, i))] + [
      _const_spec(a.shape) for a in kernel_args[1:]
  ]

  out_t = pl.pallas_call(
      kernel,
      out_shape=jax.ShapeDtypeStruct((1, n), jnp.float32),
      grid=grid,
      in_specs=in_specs,
      out_specs=pl.BlockSpec((1, tb), lambda i: (0, i)),
      compiler_params=pltpu.CompilerParams(
          dimension_semantics=("parallel",),
          vmem_limit_bytes=_VMEM_LIMIT),
  )(*kernel_args)

  scores = out_t[0, :n].reshape(n, OUTPUT_DIM)

  # L2 regularization over learnable parameters (side value of the module),
  # computed from the *unfolded* parameters in plain JAX.
  l2 = 0.0
  l2 += jnp.sum(params["input_norm"]["gamma"] ** 2)
  l2 += jnp.sum(params["input_norm"]["beta"] ** 2)
  for layer in params["layers"]:
    l2 += jnp.sum(layer["W"] ** 2) + jnp.sum(layer["b"] ** 2)
    l2 += jnp.sum(layer["bn"]["gamma"] ** 2) + jnp.sum(layer["bn"]["beta"] ** 2)
  l2 += jnp.sum(params["final"]["W"] ** 2) + jnp.sum(params["final"]["b"] ** 2)
  l2_reg = L2_LAMBDA * l2

  return scores, l2_reg


def reference_forward(x, params):
  """Pure-JAX eval-mode reference of the PyTorch module."""
  def bn(h, p):
    return (h - p["running_mean"]) / jnp.sqrt(p["running_var"] + BN_EPS) * \
        p["gamma"] + p["beta"]

  h = bn(x, params["input_norm"])
  for layer in params["layers"]:
    h = h @ layer["W"].T + layer["b"]
    h = bn(h, layer["bn"])
    h = jnp.maximum(h, 0.0)           # Dropout(0.2) is identity in eval mode
  s = h @ params["final"]["W"].T + params["final"]["b"]
  sig = jax.nn.sigmoid(s)
  return TARGET_MEAN + (sig - 0.5) * TARGET_STD


def init_params(key):
  """Deterministic synthetic parameters matching the module's shapes."""
  def bn_params(k, dim):
    k1, k2, k3, k4 = jax.random.split(k, 4)
    return {
        "gamma": 1.0 + 0.1 * jax.random.normal(k1, (dim,), jnp.float32),
        "beta": 0.1 * jax.random.normal(k2, (dim,), jnp.float32),
        "running_mean": 0.1 * jax.random.normal(k3, (dim,), jnp.float32),
        "running_var": 1.0 + 0.1 * jnp.abs(
            jax.random.normal(k4, (dim,), jnp.float32)),
    }

  key, kbn0 = jax.random.split(key)
  params = {"input_norm": bn_params(kbn0, INPUT_DIM), "layers": [],
            "final": None}
  prev = INPUT_DIM
  for dim in HIDDEN_DIMS:
    key, kw, kb, kbn = jax.random.split(key, 4)
    bound = 1.0 / jnp.sqrt(prev)
    W = jax.random.uniform(kw, (dim, prev), jnp.float32, -bound, bound)
    b = jax.random.uniform(kb, (dim,), jnp.float32, -bound, bound)
    params["layers"].append({"W": W, "b": b, "bn": bn_params(kbn, dim)})
    prev = dim

  # final layer: xavier_uniform with gain=0.01, zero bias
  key, kw = jax.random.split(key)
  a = 0.01 * jnp.sqrt(6.0 / (prev + OUTPUT_DIM))
  W4 = jax.random.uniform(kw, (OUTPUT_DIM, prev), jnp.float32, -a, a)
  b4 = jnp.zeros((OUTPUT_DIM,), jnp.float32)
  params["final"] = {"W": W4, "b": b4}
  return params


if __name__ == "__main__":
  key = jax.random.PRNGKey(0)
  key, kx, kp = jax.random.split(key, 3)

  batch = 8
  x = jax.random.normal(kx, (batch, INPUT_DIM), jnp.float32)
  params = init_params(kp)

  scores, l2_reg = scoring_forward(x, params)
  scores = jax.block_until_ready(scores)
  l2_reg = jax.block_until_ready(l2_reg)

  ref = reference_forward(x, params)

  assert scores.shape == (batch, OUTPUT_DIM)
  assert bool(jnp.all(jnp.isfinite(scores)))
  assert bool(jnp.isfinite(l2_reg))
  # bf16 matmul / VPU operands + approx reciprocal: allow a small tolerance.
  assert bool(jnp.max(jnp.abs(scores - ref)) < 5e-3)
  # scores must lie in [target_mean - 0.5*std, target_mean + 0.5*std]
  assert bool(jnp.all(scores >= TARGET_MEAN - 0.5 * TARGET_STD - 1e-3))
  assert bool(jnp.all(scores <= TARGET_MEAN + 0.5 * TARGET_STD + 1e-3))
  print("KERNEL_OK")
</pallas_src>

<mosaic_0001>
module attributes {stable_mosaic.version = 11 : i64} {
  func.func @_scoring_kernel(%arg0: i32, %arg1: memref<1x128xf32, #tpu.memory_space<vmem>>, %arg2: memref<128x1xf32, #tpu.memory_space<vmem>>, %arg3: memref<128x1xf32, #tpu.memory_space<vmem>>, %arg4: memref<64x128xbf16, #tpu.memory_space<vmem>>, %arg5: memref<64x1xf32, #tpu.memory_space<vmem>>, %arg6: memref<32x64xbf16, #tpu.memory_space<vmem>>, %arg7: memref<32x1xf32, #tpu.memory_space<vmem>>, %arg8: memref<32x1xf32, #tpu.memory_space<vmem>>, %arg9: memref<1x1xf32, #tpu.memory_space<vmem>>, %arg10: memref<1x128xf32, #tpu.memory_space<vmem>>) attributes {dimension_semantics = [#tpu.dimension_semantics<parallel>], iteration_bounds = array<i64: 1>, scalar_prefetch = 0 : i64, scratch_operands = 0 : i64, tpu.core_type = #tpu.core_type<tc>, window_params = [{transform_indices = @transform_0, window_bounds = array<i64: 1, 128>}, {pipeline_mode = #tpu.pipeline_mode<synchronous>, transform_indices = @transform_1, window_bounds = array<i64: 128, 1>}, {pipeline_mode = #tpu.pipeline_mode<synchronous>, transform_indices = @transform_2, window_bounds = array<i64: 128, 1>}, {pipeline_mode = #tpu.pipeline_mode<synchronous>, transform_indices = @transform_3, window_bounds = array<i64: 64, 128>}, {pipeline_mode = #tpu.pipeline_mode<synchronous>, transform_indices = @transform_4, window_bounds = array<i64: 64, 1>}, {pipeline_mode = #tpu.pipeline_mode<synchronous>, transform_indices = @transform_5, window_bounds = array<i64: 32, 64>}, {pipeline_mode = #tpu.pipeline_mode<synchronous>, transform_indices = @transform_6, window_bounds = array<i64: 32, 1>}, {pipeline_mode = #tpu.pipeline_mode<synchronous>, transform_indices = @transform_7, window_bounds = array<i64: 32, 1>}, {pipeline_mode = #tpu.pipeline_mode<synchronous>, transform_indices = @transform_8, window_bounds = array<i64: 1, 1>}, {transform_indices = @transform_9, window_bounds = array<i64: 1, 128>}]} {
    %c0 = arith.constant 0 : index
    %c0_0 = arith.constant 0 : index
    %0 = vector.load %arg1[%c0, %c0_0] : memref<1x128xf32, #tpu.memory_space<vmem>>, vector<1x128xf32>
    %c0_1 = arith.constant 0 : index
    %c0_2 = arith.constant 0 : index
    %1 = vector.load %arg2[%c0_1, %c0_2] : memref<128x1xf32, #tpu.memory_space<vmem>>, vector<128x1xf32>
    %2 = vector.broadcast %1 : vector<128x1xf32> to vector<128x128xf32>
    %3 = vector.broadcast %0 : vector<1x128xf32> to vector<128x128xf32>
    %4 = arith.mulf %2, %3 : vector<128x128xf32>
    %c0_3 = arith.constant 0 : index
    %c0_4 = arith.constant 0 : index
    %5 = vector.load %arg3[%c0_3, %c0_4] : memref<128x1xf32, #tpu.memory_space<vmem>>, vector<128x1xf32>
    %6 = vector.broadcast %5 : vector<128x1xf32> to vector<128x128xf32>
    %7 = arith.addf %4, %6 : vector<128x128xf32>
    %cst = arith.constant 0.000000e+00 : f32
    %8 = vector.broadcast %cst : f32 to vector<128x128xf32>
    %9 = arith.maximumf %7, %8 : vector<128x128xf32>
    %10 = arith.truncf %9 : vector<128x128xf32> to vector<128x128xbf16>
    %c0_5 = arith.constant 0 : index
    %c0_6 = arith.constant 0 : index
    %11 = vector.load %arg4[%c0_5, %c0_6] : memref<64x128xbf16, #tpu.memory_space<vmem>>, vector<64x128xbf16>
    %cst_7 = arith.constant dense<0.000000e+00> : vector<64x128xf32>
    %12 = tpu.matmul %11, %10, %cst_7 {dimension_numbers = #tpu.dot_dimension_numbers<[1], [0], [0], [1], [0, 0, 1, 1], [], []>} : vector<64x128xbf16>, vector<128x128xbf16>, vector<64x128xf32> -> vector<64x128xf32>
    %c0_8 = arith.constant 0 : index
    %c0_9 = arith.constant 0 : index
    %13 = vector.load %arg5[%c0_8, %c0_9] : memref<64x1xf32, #tpu.memory_space<vmem>>, vector<64x1xf32>
    %14 = vector.broadcast %13 : vector<64x1xf32> to vector<64x128xf32>
    %15 = arith.addf %12, %14 : vector<64x128xf32>
    %cst_10 = arith.constant 0.000000e+00 : f32
    %16 = vector.broadcast %cst_10 : f32 to vector<64x128xf32>
    %17 = arith.maximumf %15, %16 : vector<64x128xf32>
    %18 = arith.truncf %17 : vector<64x128xf32> to vector<64x128xbf16>
    %c0_11 = arith.constant 0 : index
    %c0_12 = arith.constant 0 : index
    %19 = vector.load %arg6[%c0_11, %c0_12] : memref<32x64xbf16, #tpu.memory_space<vmem>>, vector<32x64xbf16>
    %cst_13 = arith.constant dense<0.000000e+00> : vector<32x128xf32>
    %20 = tpu.matmul %19, %18, %cst_13 {dimension_numbers = #tpu.dot_dimension_numbers<[1], [0], [0], [1], [0, 0, 1, 1], [], []>} : vector<32x64xbf16>, vector<64x128xbf16>, vector<32x128xf32> -> vector<32x128xf32>
    %c0_14 = arith.constant 0 : index
    %c0_15 = arith.constant 0 : index
    %21 = vector.load %arg7[%c0_14, %c0_15] : memref<32x1xf32, #tpu.memory_space<vmem>>, vector<32x1xf32>
    %22 = vector.broadcast %21 : vector<32x1xf32> to vector<32x128xf32>
    %23 = arith.addf %20, %22 : vector<32x128xf32>
    %cst_16 = arith.constant 0.000000e+00 : f32
    %24 = vector.broadcast %cst_16 : f32 to vector<32x128xf32>
    %25 = arith.maximumf %23, %24 : vector<32x128xf32>
    %c0_17 = arith.constant 0 : index
    %c0_18 = arith.constant 0 : index
    %26 = vector.load %arg8[%c0_17, %c0_18] : memref<32x1xf32, #tpu.memory_space<vmem>>, vector<32x1xf32>
    %27 = vector.broadcast %26 : vector<32x1xf32> to vector<32x128xf32>
    %28 = arith.mulf %25, %27 : vector<32x128xf32>
    %cst_19 = arith.constant dense<0.000000e+00> : vector<128xf32>
    %29 = vector.multi_reduction <add>, %28, %cst_19 [0] : vector<32x128xf32> to vector<128xf32>
    %30 = vector.shape_cast %29 : vector<128xf32> to vector<1x128xf32>
    %c0_20 = arith.constant 0 : index
    %c0_21 = arith.constant 0 : index
    %31 = vector.load %arg9[%c0_20, %c0_21] : memref<1x1xf32, #tpu.memory_space<vmem>>, vector<1x1xf32>
    %32 = vector.broadcast %31 : vector<1x1xf32> to vector<1x128xf32>
    %33 = arith.addf %30, %32 : vector<1x128xf32>
    %cst_22 = arith.constant 0.000000e+00 : f32
    %34 = vector.broadcast %cst_22 : f32 to vector<1x128xf32>
    %35 = arith.subf %34, %33 : vector<1x128xf32>
    %36 = math.exp %35 : vector<1x128xf32>
    %cst_23 = arith.constant 1.000000e+00 : f32
    %37 = vector.broadcast %cst_23 : f32 to vector<1x128xf32>
    %38 = arith.addf %37, %36 : vector<1x128xf32>
    %39 = tpu.reciprocal %38 {approx = true} : vector<1x128xf32> -> vector<1x128xf32>
    %cst_24 = arith.constant 1.000000e-01 : f32
    %40 = vector.broadcast %cst_24 : f32 to vector<1x128xf32>
    %41 = arith.mulf %40, %39 : vector<1x128xf32>
    %cst_25 = arith.constant 4.500000e-01 : f32
    %42 = vector.broadcast %cst_25 : f32 to vector<1x128xf32>
    %43 = arith.addf %42, %41 : vector<1x128xf32>
    %c0_26 = arith.constant 0 : index
    %c0_27 = arith.constant 0 : index
    %44 = vector.load %arg10[%c0_26, %c0_27] : memref<1x128xf32, #tpu.memory_space<vmem>>, vector<1x128xf32>
    tpu.vector_store %arg10[%c0_26, %c0_27], %43 {strides = array<i32>} : memref<1x128xf32, #tpu.memory_space<vmem>>, vector<1x128xf32>,
    return
  }
  func.func @transform_0(%arg0: i32) -> (i32, i32) {
    %c0_i32 = arith.constant 0 : i32
    %c0_i32_0 = arith.constant 0 : i32
    return %c0_i32, %arg0 : i32, i32
  }
  func.func @transform_1(%arg0: i32) -> (i32, i32) {
    %c0_i32 = arith.constant 0 : i32
    %c0_i32_0 = arith.constant 0 : i32
    %c0_i32_1 = arith.constant 0 : i32
    return %c0_i32, %c0_i32_0 : i32, i32
  }
  func.func @transform_2(%arg0: i32) -> (i32, i32) {
    %c0_i32 = arith.constant 0 : i32
    %c0_i32_0 = arith.constant 0 : i32
    %c0_i32_1 = arith.constant 0 : i32
    return %c0_i32, %c0_i32_0 : i32, i32
  }
  func.func @transform_3(%arg0: i32) -> (i32, i32) {
    %c0_i32 = arith.constant 0 : i32
    %c0_i32_0 = arith.constant 0 : i32
    %c0_i32_1 = arith.constant 0 : i32
    return %c0_i32, %c0_i32_0 : i32, i32
  }
  func.func @transform_4(%arg0: i32) -> (i32, i32) {
    %c0_i32 = arith.constant 0 : i32
    %c0_i32_0 = arith.constant 0 : i32
    %c0_i32_1 = arith.constant 0 : i32
    return %c0_i32, %c0_i32_0 : i32, i32
  }
  func.func @transform_5(%arg0: i32) -> (i32, i32) {
    %c0_i32 = arith.constant 0 : i32
    %c0_i32_0 = arith.constant 0 : i32
    %c0_i32_1 = arith.constant 0 : i32
    return %c0_i32, %c0_i32_0 : i32, i32
  }
  func.func @transform_6(%arg0: i32) -> (i32, i32) {
    %c0_i32 = arith.constant 0 : i32
    %c0_i32_0 = arith.constant 0 : i32
    %c0_i32_1 = arith.constant 0 : i32
    return %c0_i32, %c0_i32_0 : i32, i32
  }
  func.func @transform_7(%arg0: i32) -> (i32, i32) {
    %c0_i32 = arith.constant 0 : i32
    %c0_i32_0 = arith.constant 0 : i32
    %c0_i32_1 = arith.constant 0 : i32
    return %c0_i32, %c0_i32_0 : i32, i32
  }
  func.func @transform_8(%arg0: i32) -> (i32, i32) {
    %c0_i32 = arith.constant 0 : i32
    %c0_i32_0 = arith.constant 0 : i32
    %c0_i32_1 = arith.constant 0 : i32
    return %c0_i32, %c0_i32_0 : i32, i32
  }
  func.func @transform_9(%arg0: i32) -> (i32, i32) {
    %c0_i32 = arith.constant 0 : i32
    %c0_i32_0 = arith.constant 0 : i32
    return %c0_i32, %arg0 : i32, i32
  }
}

</mosaic_0001>

<llo_original>
// kernel: scoring_forward.1
$region0: #{scoring_forward.1}
  #allocation0 [shape = 'u32[]', space=smem, size = 0x4, offset = 0x4, fixed_abs, tag = 'smem constant byte address 0x4 - core index']
  #allocation1 [shape = 'u32[144,128]{1,0:T(1,128)}', space=vmem, size = 0x12000, scoped, tag = 'internal scratch']
  #allocation2 [shape = 'f32[1,1]{1,0:T(1,128)S(1)}', space=vmem, size = 0x200, scoped, tag = 'scoped memory for scoring_forward.1']
  %s0 = inlined_call_operand.vmem [shape: f32[1,8], index: 0, kind: input, shape index: {}]
  %s1 = inlined_call_operand.vmem [shape: f32[128,1], index: 1, kind: input, shape index: {}]
  %s2 = inlined_call_operand.vmem [shape: f32[128,1], index: 2, kind: input, shape index: {}]
  %s3 = inlined_call_operand.vmem [shape: bf16[64,128], index: 3, kind: input, shape index: {}]
  %s4 = inlined_call_operand.vmem [shape: f32[64,1], index: 4, kind: input, shape index: {}]
  %s5 = inlined_call_operand.vmem [shape: bf16[32,64], index: 5, kind: input, shape index: {}]
  %s6 = inlined_call_operand.vmem [shape: f32[32,1], index: 6, kind: input, shape index: {}]
  %s7 = inlined_call_operand.vmem [shape: f32[32,1], index: 7, kind: input, shape index: {}]
  %s8 = inlined_call_operand.<no memory space> [shape: f32[1,1], index: 8, kind: input, shape index: {}]
  %s9 = inlined_call_operand.hbm [shape: f32[1,8], index: 9, kind: output, shape index: {}]
  %s10 = sld [smem:[#allocation0]]
  $region46: #{scoring_forward.1} parent=0
    _
  %s12 = ssub.s32 1, %s10
  %s13 = scalar_select 0, %s12, %s10
  %v14 = vstv %s8
  %15 = vst [vmem:[#allocation2] sm:$0x1] %v14
  $region1: #{scoring_forward.1} parent=0
    #allocation3 [shape = 'u8[512]{0}', space=vmem, size = 0x400, scoped, tag = 'output window, operand 0, single buffered']
    #allocation4 [shape = 's32[1]{0}', space=sflag, size = 0x4, scoped, tag = 'scoped memory for scoring_forward.1']
    %16 = vsyncpa [#allocation4], 0
    // Predicated region
    $region2: #{scoring_forward.1} parent=1 // pred_check
      _
    $region3: #{scoring_forward.1} parent=1 // pred_check_branch
      %18 = sbr.rel (0) target = $region5
    $region4: #{scoring_forward.1} parent=1 // pred_region
      _
    $region5: #{scoring_forward.1} parent=1 // pred_fallthru
      _
    // Predicated region
    $region6: #{scoring_forward.1} parent=1 // pred_check
      _
    $region7: #{scoring_forward.1} parent=1 // pred_check_branch
      %20 = sbr.rel (0) target = $region9
    $region8: #{scoring_forward.1} parent=1 // pred_region
      _
    $region9: #{scoring_forward.1} parent=1 // pred_fallthru
      _
    // Predicated region
    $region10: #{scoring_forward.1} parent=1 // pred_check
      _
    $region11: #{scoring_forward.1} parent=1 // pred_check_branch
      %22 = sbr.rel (0) target = $region13
    $region12: #{scoring_forward.1} parent=1 // pred_region
      _
    $region13: #{scoring_forward.1} parent=1 // pred_fallthru
      _
    // Predicated region
    $region14: #{scoring_forward.1} parent=1 // pred_check
      _
    $region15: #{scoring_forward.1} parent=1 // pred_check_branch
      %24 = sbr.rel (0) target = $region17
    $region16: #{scoring_forward.1} parent=1 // pred_region
      _
    $region17: #{scoring_forward.1} parent=1 // pred_fallthru
      _
    // Predicated region
    $region18: #{scoring_forward.1} parent=1 // pred_check
      _
    $region19: #{scoring_forward.1} parent=1 // pred_check_branch
      %26 = sbr.rel (0) target = $region21
    $region20: #{scoring_forward.1} parent=1 // pred_region
      _
    $region21: #{scoring_forward.1} parent=1 // pred_fallthru
      _
    // Predicated region
    $region22: #{scoring_forward.1} parent=1 // pred_check
      _
    $region23: #{scoring_forward.1} parent=1 // pred_check_branch
      %28 = sbr.rel (0) target = $region25
    $region24: #{scoring_forward.1} parent=1 // pred_region
      _
    $region25: #{scoring_forward.1} parent=1 // pred_fallthru
      _
    // Predicated region
    $region26: #{scoring_forward.1} parent=1 // pred_check
      _
    $region27: #{scoring_forward.1} parent=1 // pred_check_branch
      %30 = sbr.rel (0) target = $region29
    $region28: #{scoring_forward.1} parent=1 // pred_region
      _
    $region29: #{scoring_forward.1} parent=1 // pred_fallthru
      _
    // Predicated region
    $region30: #{scoring_forward.1} parent=1 // pred_check
      _
    $region31: #{scoring_forward.1} parent=1 // pred_check_branch
      %32 = sbr.rel (0) target = $region33
    $region32: #{scoring_forward.1} parent=1 // pred_region
      _
    $region33: #{scoring_forward.1} parent=1 // pred_fallthru
      _
    // Predicated region
    $region34: #{scoring_forward.1} parent=1 // pred_check
      _
    $region35: #{scoring_forward.1} parent=1 // pred_check_branch
      %34 = sbr.rel (0) target = $region37
    $region36: #{scoring_forward.1} parent=1 // pred_region
      _
    $region37: #{scoring_forward.1} parent=1 // pred_fallthru
      _
    %v36 = vld [vmem:[%s0] sm:$0x1]
    %v37 = vld [vmem:[%s1] sm:$0xff]
    %v38 = vld [vmem:[%s1 + $0x8] sm:$0xff]
    %v39 = vld [vmem:[%s1 + $0x10] sm:$0xff]
    %v40 = vld [vmem:[%s1 + $0x18] sm:$0xff]
    %v41 = vld [vmem:[%s1 + $0x20] sm:$0xff]
    %v42 = vld [vmem:[%s1 + $0x28] sm:$0xff]
    %v43 = vld [vmem:[%s1 + $0x30] sm:$0xff]
    %v44 = vld [vmem:[%s1 + $0x38] sm:$0xff]
    %v45 = vld [vmem:[%s1 + $0x40] sm:$0xff]
    %v46 = vld [vmem:[%s1 + $0x48] sm:$0xff]
    %v47 = vld [vmem:[%s1 + $0x50] sm:$0xff]
    %v48 = vld [vmem:[%s1 + $0x58] sm:$0xff]
    %v49 = vld [vmem:[%s1 + $0x60] sm:$0xff]
    %v50 = vld [vmem:[%s1 + $0x68] sm:$0xff]
    %v51 = vld [vmem:[%s1 + $0x70] sm:$0xff]
    %v52 = vld [vmem:[%s1 + $0x78] sm:$0xff]
    %54 = vset.pattern.permute.xlu0 0
    %55 = vperm.xlu0 %54, %v37
    %v56 = vpop.permute.xlu0 %55
    %59 = vset.pattern.permute.xlu0 0
    %60 = vperm.xlu0 %59, %v38
    %v61 = vpop.permute.xlu0 %60
    %64 = vset.pattern.permute.xlu0 0
    %65 = vperm.xlu0 %64, %v39
    %v66 = vpop.permute.xlu0 %65
    %69 = vset.pattern.permute.xlu0 0
    %70 = vperm.xlu0 %69, %v40
    %v71 = vpop.permute.xlu0 %70
    %74 = vset.pattern.permute.xlu0 0
    %75 = vperm.xlu0 %74, %v41
    %v76 = vpop.permute.xlu0 %75
    %79 = vset.pattern.permute.xlu0 0
    %80 = vperm.xlu0 %79, %v42
    %v81 = vpop.permute.xlu0 %80
    %84 = vset.pattern.permute.xlu0 0
    %85 = vperm.xlu0 %84, %v43
    %v86 = vpop.permute.xlu0 %85
    %89 = vset.pattern.permute.xlu0 0
    %90 = vperm.xlu0 %89, %v44
    %v91 = vpop.permute.xlu0 %90
    %94 = vset.pattern.permute.xlu0 0
    %95 = vperm.xlu0 %94, %v45
    %v96 = vpop.permute.xlu0 %95
    %99 = vset.pattern.permute.xlu0 0
    %100 = vperm.xlu0 %99, %v46
    %v101 = vpop.permute.xlu0 %100
    %104 = vset.pattern.permute.xlu0 0
    %105 = vperm.xlu0 %104, %v47
    %v106 = vpop.permute.xlu0 %105
    %109 = vset.pattern.permute.xlu0 0
    %110 = vperm.xlu0 %109, %v48
    %v111 = vpop.permute.xlu0 %110
    %114 = vset.pattern.permute.xlu0 0
    %115 = vperm.xlu0 %114, %v49
    %v116 = vpop.permute.xlu0 %115
    %119 = vset.pattern.permute.xlu0 0
    %120 = vperm.xlu0 %119, %v50
    %v121 = vpop.permute.xlu0 %120
    %124 = vset.pattern.permute.xlu0 0
    %125 = vperm.xlu0 %124, %v51
    %v126 = vpop.permute.xlu0 %125
    %129 = vset.pattern.permute.xlu0 0
    %130 = vperm.xlu0 %129, %v52
    %v131 = vpop.permute.xlu0 %130
    %v134 = vlaneseq
    %v135 = vshrl.u32 %v134, 7
    %v136 = vsub.s32 0, %v135
    %v137 = vrot.slane %v36, %v136
    %v139 = vmul.f32 %v56, %v137
    %v140 = vmul.f32 %v61, %v137
    %v141 = vmul.f32 %v66, %v137
    %v142 = vmul.f32 %v71, %v137
    %v143 = vmul.f32 %v76, %v137
    %v144 = vmul.f32 %v81, %v137
    %v145 = vmul.f32 %v86, %v137
    %v146 = vmul.f32 %v91, %v137
    %v147 = vmul.f32 %v96, %v137
    %v148 = vmul.f32 %v101, %v137
    %v149 = vmul.f32 %v106, %v137
    %v150 = vmul.f32 %v111, %v137
    %v151 = vmul.f32 %v116, %v137
    %v152 = vmul.f32 %v121, %v137
    %v153 = vmul.f32 %v126, %v137
    %v154 = vmul.f32 %v131, %v137
    %v155 = vld [vmem:[%s2] sm:$0xff]
    %v156 = vld [vmem:[%s2 + $0x8] sm:$0xff]
    %v157 = vld [vmem:[%s2 + $0x10] sm:$0xff]
    %v158 = vld [vmem:[%s2 + $0x18] sm:$0xff]
    %v159 = vld [vmem:[%s2 + $0x20] sm:$0xff]
    %v160 = vld [vmem:[%s2 + $0x28] sm:$0xff]
    %v161 = vld [vmem:[%s2 + $0x30] sm:$0xff]
    %v162 = vld [vmem:[%s2 + $0x38] sm:$0xff]
    %v163 = vld [vmem:[%s2 + $0x40] sm:$0xff]
    %v164 = vld [vmem:[%s2 + $0x48] sm:$0xff]
    %v165 = vld [vmem:[%s2 + $0x50] sm:$0xff]
    %v166 = vld [vmem:[%s2 + $0x58] sm:$0xff]
    %v167 = vld [vmem:[%s2 + $0x60] sm:$0xff]
    %v168 = vld [vmem:[%s2 + $0x68] sm:$0xff]
    %v169 = vld [vmem:[%s2 + $0x70] sm:$0xff]
    %v170 = vld [vmem:[%s2 + $0x78] sm:$0xff]
    %172 = vset.pattern.permute.xlu0 0
    %173 = vperm.xlu0 %172, %v155
    %v174 = vpop.permute.xlu0 %173
    %177 = vset.pattern.permute.xlu0 0
    %178 = vperm.xlu0 %177, %v156
    %v179 = vpop.permute.xlu0 %178
    %182 = vset.pattern.permute.xlu0 0
    %183 = vperm.xlu0 %182, %v157
    %v184 = vpop.permute.xlu0 %183
    %187 = vset.pattern.permute.xlu0 0
    %188 = vperm.xlu0 %187, %v158
    %v189 = vpop.permute.xlu0 %188
    %192 = vset.pattern.permute.xlu0 0
    %193 = vperm.xlu0 %192, %v159
    %v194 = vpop.permute.xlu0 %193
    %197 = vset.pattern.permute.xlu0 0
    %198 = vperm.xlu0 %197, %v160
    %v199 = vpop.permute.xlu0 %198
    %202 = vset.pattern.permute.xlu0 0
    %203 = vperm.xlu0 %202, %v161
    %v204 = vpop.permute.xlu0 %203
    %207 = vset.pattern.permute.xlu0 0
    %208 = vperm.xlu0 %207, %v162
    %v209 = vpop.permute.xlu0 %208
    %212 = vset.pattern.permute.xlu0 0
    %213 = vperm.xlu0 %212, %v163
    %v214 = vpop.permute.xlu0 %213
    %217 = vset.pattern.permute.xlu0 0
    %218 = vperm.xlu0 %217, %v164
    %v219 = vpop.permute.xlu0 %218
    %222 = vset.pattern.permute.xlu0 0
    %223 = vperm.xlu0 %222, %v165
    %v224 = vpop.permute.xlu0 %223
    %227 = vset.pattern.permute.xlu0 0
    %228 = vperm.xlu0 %227, %v166
    %v229 = vpop.permute.xlu0 %228
    %232 = vset.pattern.permute.xlu0 0
    %233 = vperm.xlu0 %232, %v167
    %v234 = vpop.permute.xlu0 %233
    %237 = vset.pattern.permute.xlu0 0
    %238 = vperm.xlu0 %237, %v168
    %v239 = vpop.permute.xlu0 %238
    %242 = vset.pattern.permute.xlu0 0
    %243 = vperm.xlu0 %242, %v169
    %v244 = vpop.permute.xlu0 %243
    %247 = vset.pattern.permute.xlu0 0
    %248 = vperm.xlu0 %247, %v170
    %v249 = vpop.permute.xlu0 %248
    %v251 = vadd.f32 %v139, %v174
    %v252 = vadd.f32 %v140, %v179
    %v253 = vadd.f32 %v141, %v184
    %v254 = vadd.f32 %v142, %v189
    %v255 = vadd.f32 %v143, %v194
    %v256 = vadd.f32 %v144, %v199
    %v257 = vadd.f32 %v145, %v204
    %v258 = vadd.f32 %v146, %v209
    %v259 = vadd.f32 %v147, %v214
    %v260 = vadd.f32 %v148, %v219
    %v261 = vadd.f32 %v149, %v224
    %v262 = vadd.f32 %v150, %v229
    %v263 = vadd.f32 %v151, %v234
    %v264 = vadd.f32 %v152, %v239
    %v265 = vadd.f32 %v153, %v244
    %v266 = vadd.f32 %v154, %v249
    %v267 = vmax.f32 %v251, 0.0
    %v268 = vmax.f32 %v252, 0.0
    %v269 = vmax.f32 %v253, 0.0
    %v270 = vmax.f32 %v254, 0.0
    %v271 = vmax.f32 %v255, 0.0
    %v272 = vmax.f32 %v256, 0.0
    %v273 = vmax.f32 %v257, 0.0
    %v274 = vmax.f32 %v258, 0.0
    %v275 = vmax.f32 %v259, 0.0
    %v276 = vmax.f32 %v260, 0.0
    %v277 = vmax.f32 %v261, 0.0
    %v278 = vmax.f32 %v262, 0.0
    %v279 = vmax.f32 %v263, 0.0
    %v280 = vmax.f32 %v264, 0.0
    %v281 = vmax.f32 %v265, 0.0
    %v282 = vmax.f32 %v266, 0.0
    %v283 = vpack.c.bf16 %v268, %v267
    %v284 = vpack.c.bf16 %v270, %v269
    %v285 = vpack.c.bf16 %v272, %v271
    %v286 = vpack.c.bf16 %v274, %v273
    %v287 = vpack.c.bf16 %v276, %v275
    %v288 = vpack.c.bf16 %v278, %v277
    %v289 = vpack.c.bf16 %v280, %v279
    %v290 = vpack.c.bf16 %v282, %v281
    %v291 = vld [vmem:[%s3] sm:$0xf]
    %v292 = vld [vmem:[%s3 + $0x4] sm:$0xf]
    %v293 = vld [vmem:[%s3 + $0x8] sm:$0xf]
    %v294 = vld [vmem:[%s3 + $0xc] sm:$0xf]
    %v295 = vld [vmem:[%s3 + $0x10] sm:$0xf]
    %v296 = vld [vmem:[%s3 + $0x14] sm:$0xf]
    %v297 = vld [vmem:[%s3 + $0x18] sm:$0xf]
    %v298 = vld [vmem:[%s3 + $0x1c] sm:$0xf]
    %v299 = vld [vmem:[%s4] sm:$0xff]
    %v300 = vld [vmem:[%s4 + $0x8] sm:$0xff]
    %v301 = vld [vmem:[%s4 + $0x10] sm:$0xff]
    %v302 = vld [vmem:[%s4 + $0x18] sm:$0xff]
    %v303 = vld [vmem:[%s4 + $0x20] sm:$0xff]
    %v304 = vld [vmem:[%s4 + $0x28] sm:$0xff]
    %v305 = vld [vmem:[%s4 + $0x30] sm:$0xff]
    %v306 = vld [vmem:[%s4 + $0x38] sm:$0xff]
    %308 = vset.pattern.permute.xlu0 0
    %309 = vperm.xlu0 %308, %v299
    %v310 = vpop.permute.xlu0 %309
    %313 = vset.pattern.permute.xlu0 0
    %314 = vperm.xlu0 %313, %v300
    %v315 = vpop.permute.xlu0 %314
    %318 = vset.pattern.permute.xlu0 0
    %319 = vperm.xlu0 %318, %v301
    %v320 = vpop.permute.xlu0 %319
    %323 = vset.pattern.permute.xlu0 0
    %324 = vperm.xlu0 %323, %v302
    %v325 = vpop.permute.xlu0 %324
    %328 = vset.pattern.permute.xlu0 0
    %329 = vperm.xlu0 %328, %v303
    %v330 = vpop.permute.xlu0 %329
    %333 = vset.pattern.permute.xlu0 0
    %334 = vperm.xlu0 %333, %v304
    %v335 = vpop.permute.xlu0 %334
    %338 = vset.pattern.permute.xlu0 0
    %339 = vperm.xlu0 %338, %v305
    %v340 = vpop.permute.xlu0 %339
    %343 = vset.pattern.permute.xlu0 0
    %344 = vperm.xlu0 %343, %v306
    %v345 = vpop.permute.xlu0 %344
    %v355 = vunpack.c.l.b16 %v291
    %v356 = vunpack.c.l.b16 %v292
    %v357 = vunpack.c.l.b16 %v293
    %v358 = vunpack.c.l.b16 %v294
    %v359 = vunpack.c.l.b16 %v295
    %v360 = vunpack.c.l.b16 %v296
    %v361 = vunpack.c.l.b16 %v297
    %v362 = vunpack.c.l.b16 %v298
    %v363 = vpack.c.b16 %v356, %v355
    %v364 = vpack.c.b16 %v358, %v357
    %v365 = vpack.c.b16 %v360, %v359
    %v366 = vpack.c.b16 %v362, %v361
    %371 = vmatprep.subr.bf16.mxu0 0
    %372 = vmatpush1.bf16.msra.mxu0 %v283
    %373 = vmatprep.subr.bf16.mxu0 0
    %374 = vmatpush1.bf16.msra.mxu0 %v284
    %375 = vmatprep.subr.bf16.mxu0 0
    %376 = vmatpush1.bf16.msra.mxu0 %v285
    %377 = vmatprep.subr.bf16.mxu0 0
    %378 = vmatpush1.bf16.msra.mxu0 %v286
    %379 = vmatprep.subr.bf16.mxu0 0
    %380 = vmatpush1.bf16.msra.mxu0 %v287
    %381 = vmatprep.subr.bf16.mxu0 0
    %382 = vmatpush1.bf16.msra.mxu0 %v288
    %383 = vmatprep.subr.bf16.mxu0 0
    %384 = vmatpush1.bf16.msra.mxu0 %v289
    %385 = vmatprep.subr.bf16.mxu0 0
    %386 = vmatpush1.bf16.msra.mxu0 %v290
    %387 = vmatprep.subr.bf16.mxu0 0
    %388 = vmatpush1.bf16.msra.mxu0 0
    %389 = vmatprep.subr.bf16.mxu0 0
    %390 = vmatpush1.bf16.msra.mxu0 0
    %391 = vmatprep.subr.bf16.mxu0 0
    %392 = vmatpush1.bf16.msra.mxu0 0
    %393 = vmatprep.subr.bf16.mxu0 0
    %394 = vmatpush1.bf16.msra.mxu0 0
    %395 = vmatprep.subr.bf16.mxu0 0
    %396 = vmatpush1.bf16.msra.mxu0 0
    %397 = vmatprep.subr.bf16.mxu0 0
    %398 = vmatpush1.bf16.msra.mxu0 0
    %399 = vmatprep.subr.bf16.mxu0 0
    %400 = vmatpush1.bf16.msra.mxu0 0
    %401 = vmatprep.subr.bf16.mxu0 0
    %402 = vmatpush1.bf16.msra.mxu0 0
    %403 = vmatprep.mubr.bf16.mxu0 0
    %404 = vmatmul.mubr.bf16.gmra.mrb[0].mxu0 %v363
    %v405 = vpop.f32.mrb[0].mxu0
    %v406 = vadd.f32 %v310, %v405
    %v407 = vpop.f32.mrb[0].mxu0
    %v408 = vpop.f32.mrb[0].mxu0
    %v409 = vadd.f32 %v315, %v408
    %v410 = vpop.f32.mrb[0].mxu0
    %411 = vmatprep.mubr.bf16.mxu0 0
    %412 = vmatmul.mubr.bf16.gmra.mrb[0].mxu0 %v364
    %v413 = vpop.f32.mrb[0].mxu0
    %v414 = vadd.f32 %v320, %v413
    %v415 = vpop.f32.mrb[0].mxu0
    %v416 = vpop.f32.mrb[0].mxu0
    %v417 = vadd.f32 %v325, %v416
    %v418 = vpop.f32.mrb[0].mxu0
    %419 = vmatprep.mubr.bf16.mxu0 0
    %420 = vmatmul.mubr.bf16.gmra.mrb[0].mxu0 %v365
    %v421 = vpop.f32.mrb[0].mxu0
    %v422 = vadd.f32 %v330, %v421
    %v423 = vpop.f32.mrb[0].mxu0
    %v424 = vpop.f32.mrb[0].mxu0
    %v425 = vadd.f32 %v335, %v424
    %v426 = vpop.f32.mrb[0].mxu0
    %427 = vmatprep.mubr.bf16.mxu0 0
    %428 = vmatmul.mubr.bf16.gmra.mrb[0].mxu0 %v366
    %v429 = vpop.f32.mrb[0].mxu0
    %v430 = vadd.f32 %v340, %v429
    %v431 = vpop.f32.mrb[0].mxu0
    %v432 = vpop.f32.mrb[0].mxu0
    %v433 = vadd.f32 %v345, %v432
    %v434 = vpop.f32.mrb[0].mxu0
    %435 = vdwg.mxu0
    %v436 = vmax.f32 %v406, 0.0
    %v437 = vmax.f32 %v409, 0.0
    %v438 = vmax.f32 %v414, 0.0
    %v439 = vmax.f32 %v417, 0.0
    %v440 = vmax.f32 %v422, 0.0
    %v441 = vmax.f32 %v425, 0.0
    %v442 = vmax.f32 %v430, 0.0
    %v443 = vmax.f32 %v433, 0.0
    %v444 = vpack.c.bf16 %v437, %v436
    %v445 = vpack.c.bf16 %v439, %v438
    %v446 = vpack.c.bf16 %v441, %v440
    %v447 = vpack.c.bf16 %v443, %v442
    %v448 = vld [vmem:[%s5] sm:$0xf]
    %v449 = vld [vmem:[%s5 + $0x4] sm:$0xf]
    %v450 = vld [vmem:[%s5 + $0x8] sm:$0xf]
    %v451 = vld [vmem:[%s5 + $0xc] sm:$0xf]
    %v452 = vld [vmem:[%s6] sm:$0xff]
    %v453 = vld [vmem:[%s6 + $0x8] sm:$0xff]
    %v454 = vld [vmem:[%s6 + $0x10] sm:$0xff]
    %v455 = vld [vmem:[%s6 + $0x18] sm:$0xff]
    %457 = vset.pattern.permute.xlu0 0
    %458 = vperm.xlu0 %457, %v452
    %v459 = vpop.permute.xlu0 %458
    %462 = vset.pattern.permute.xlu0 0
    %463 = vperm.xlu0 %462, %v453
    %v464 = vpop.permute.xlu0 %463
    %467 = vset.pattern.permute.xlu0 0
    %468 = vperm.xlu0 %467, %v454
    %v469 = vpop.permute.xlu0 %468
    %472 = vset.pattern.permute.xlu0 0
    %473 = vperm.xlu0 %472, %v455
    %v474 = vpop.permute.xlu0 %473
    %v480 = vunpack.c.l.b16 %v448
    %v481 = vunpack.c.l.b16 %v449
    %v482 = vunpack.c.l.b16 %v450
    %v483 = vunpack.c.l.b16 %v451
    %v484 = vpack.c.b16 %v481, %v480
    %v485 = vpack.c.b16 %v483, %v482
    %vm486 = vcmask 523264
    %v488 = vsel %vm486, %v484, 0
    %v491 = vsel %vm486, %v485, 0
    %493 = vmatprep.subr.bf16.mxu0 0
    %494 = vmatpush1.bf16.msra.mxu0 %v444
    %495 = vmatprep.subr.bf16.mxu0 0
    %496 = vmatpush1.bf16.msra.mxu0 %v445
    %497 = vmatprep.subr.bf16.mxu0 0
    %498 = vmatpush1.bf16.msra.mxu0 %v446
    %499 = vmatprep.subr.bf16.mxu0 0
    %500 = vmatpush1.bf16.msra.mxu0 %v447
    %501 = vmatprep.subr.bf16.mxu0 0
    %502 = vmatpush1.bf16.msra.mxu0 0
    %503 = vmatprep.subr.bf16.mxu0 0
    %504 = vmatpush1.bf16.msra.mxu0 0
    %505 = vmatprep.subr.bf16.mxu0 0
    %506 = vmatpush1.bf16.msra.mxu0 0
    %507 = vmatprep.subr.bf16.mxu0 0
    %508 = vmatpush1.bf16.msra.mxu0 0
    %509 = vmatprep.subr.bf16.mxu0 0
    %510 = vmatpush1.bf16.msra.mxu0 0
    %511 = vmatprep.subr.bf16.mxu0 0
    %512 = vmatpush1.bf16.msra.mxu0 0
    %513 = vmatprep.subr.bf16.mxu0 0
    %514 = vmatpush1.bf16.msra.mxu0 0
    %515 = vmatprep.subr.bf16.mxu0 0
    %516 = vmatpush1.bf16.msra.mxu0 0
    %517 = vmatprep.subr.bf16.mxu0 0
    %518 = vmatpush1.bf16.msra.mxu0 0
    %519 = vmatprep.subr.bf16.mxu0 0
    %520 = vmatpush1.bf16.msra.mxu0 0
    %521 = vmatprep.subr.bf16.mxu0 0
    %522 = vmatpush1.bf16.msra.mxu0 0
    %523 = vmatprep.subr.bf16.mxu0 0
    %524 = vmatpush1.bf16.msra.mxu0 0
    %525 = vmatprep.mubr.bf16.mxu0 0
    %526 = vmatmul.mubr.bf16.gmra.mrb[0].mxu0 %v488
    %v527 = vpop.f32.mrb[0].mxu0
    %v528 = vadd.f32 %v459, %v527
    %v529 = vpop.f32.mrb[0].mxu0
    %v530 = vpop.f32.mrb[0].mxu0
    %v531 = vadd.f32 %v464, %v530
    %v532 = vpop.f32.mrb[0].mxu0
    %533 = vmatprep.mubr.bf16.mxu0 0
    %534 = vmatmul.mubr.bf16.gmra.mrb[0].mxu0 %v491
    %v535 = vpop.f32.mrb[0].mxu0
    %v536 = vadd.f32 %v469, %v535
    %v537 = vpop.f32.mrb[0].mxu0
    %v538 = vpop.f32.mrb[0].mxu0
    %v539 = vadd.f32 %v474, %v538
    %v540 = vpop.f32.mrb[0].mxu0
    %541 = vdwg.mxu0
    %v542 = vmax.f32 %v528, 0.0
    %v543 = vmax.f32 %v531, 0.0
    %v544 = vmax.f32 %v536, 0.0
    %v545 = vmax.f32 %v539, 0.0
    %v546 = vld [vmem:[%s7] sm:$0xff]
    %v547 = vld [vmem:[%s7 + $0x8] sm:$0xff]
    %v548 = vld [vmem:[%s7 + $0x10] sm:$0xff]
    %v549 = vld [vmem:[%s7 + $0x18] sm:$0xff]
    %551 = vset.pattern.permute.xlu0 0
    %552 = vperm.xlu0 %551, %v546
    %v553 = vpop.permute.xlu0 %552
    %556 = vset.pattern.permute.xlu0 0
    %557 = vperm.xlu0 %556, %v547
    %v558 = vpop.permute.xlu0 %557
    %561 = vset.pattern.permute.xlu0 0
    %562 = vperm.xlu0 %561, %v548
    %v563 = vpop.permute.xlu0 %562
    %566 = vset.pattern.permute.xlu0 0
    %567 = vperm.xlu0 %566, %v549
    %v568 = vpop.permute.xlu0 %567
    %v570 = vmul.f32 %v542, %v553
    %v571 = vmul.f32 %v543, %v558
    %v572 = vmul.f32 %v544, %v563
    %v573 = vmul.f32 %v545, %v568
    %v574 = vadd.f32 %v570, %v571
    %v575 = vadd.f32 %v574, %v572
    %v576 = vadd.f32 %v575, %v573
    %v577 = vrot.slane %v576, 4
    %v578 = vadd.f32 %v576, %v577
    %v579 = vrot.slane %v578, 2
    %v580 = vadd.f32 %v578, %v579
    %v581 = vrot.slane %v580, 1
    %v582 = vadd.f32 %v580, %v581
    %v583 = vld [vmem:[#allocation2] sm:$0x1]
    %585 = vset.pattern.permute.xlu0 0
    %586 = vperm.xlu0 %585, %v583
    %v587 = vpop.permute.xlu0 %586
    %v589 = vlaneseq
    %v590 = vshrl.u32 %v589, 7
    %v591 = vsub.s32 0, %v590
    %v592 = vrot.slane %v587, %v591
    %v593 = vadd.f32 %v582, %v592
    %v594 = vsub.f32 0.0, %v593
    %v595 = vmul.f32 %v594, 1.442695
    %v596 = vpow.pop %v595
    %v597 = vadd.f32 %v596, 1.0
    %v598 = vrcp.pop %v597
    %v599 = vmul.f32 %v598, 0.1
    %v600 = vadd.f32 %v599, 0.45
    %601 = vst [vmem:[#allocation3] sm:$0x1] %v600
    // Predicated region
    $region38: #{scoring_forward.1} parent=1 // pred_check
      _
    $region39: #{scoring_forward.1} parent=1 // pred_check_branch
      %603 = sbr.rel (0) target = $region41
    $region40: #{scoring_forward.1} parent=1 // pred_region
      %s605 = ssub.s32 16, 16
      %606 = vsyncadd [#allocation4], %s605
      %s608 = sshll.u32 [#allocation3], 4
      %s609 = int_to_ptr.vmem [resolvable:$true] %s608
      %611 = dma.vmem_to_hbm [thread:$0]  %s609, 16, %s9, [#allocation4]
    $region41: #{scoring_forward.1} parent=1 // pred_fallthru
      _
    // Predicated region
    $region42: #{scoring_forward.1} parent=1 // pred_check
      _
    $region43: #{scoring_forward.1} parent=1 // pred_check_branch
      %613 = sbr.rel (0) target = $region45
    $region44: #{scoring_forward.1} parent=1 // pred_region
      %614 = dma.done [#allocation4], 16
    $region45: #{scoring_forward.1} parent=1 // pred_fallthru
      _
    %615 = vsyncpa [#allocation4], 1

</llo_original>
